<compile_context>
chip_gen: v5e
topology: v5e:2x2
jax: 0.10.0
libtpu: 0.0.40
codegen_flags: <defaults>
</compile_context>

<pallas_src>
import functools
import math

import jax
import jax.numpy as jnp
from jax.experimental import pallas as pl
from jax.experimental.pallas import tpu as pltpu

LANE = 128
F_IN, H1, H2, H3, OUT = 8, 100, 100, 50, 1


def _round_up(x, m):
    return (x + m - 1) // m * m


def _pad2(a, shape):
    return jnp.pad(a, [(0, shape[0] - a.shape[0]), (0, shape[1] - a.shape[1])])


# ---------------------------------------------------------------------------
# Kernel: one batch tile through all four layers (weights resident in VMEM).
# ---------------------------------------------------------------------------
def mlp_kernel(x_ref, w1_ref, b1_ref, w2_ref, b2_ref,
               w3_ref, b3_ref, w4_ref, b4_ref, o_ref):
    x = x_ref[...]                                    # (TB, 8) bf16
    h = jnp.dot(x, w1_ref[...], preferred_element_type=jnp.float32) + b1_ref[...]
    h = jnp.maximum(h, 0.0).astype(w2_ref.dtype)      # (TB, 128)
    h = jnp.dot(h, w2_ref[...], preferred_element_type=jnp.float32) + b2_ref[...]
    h = jnp.maximum(h, 0.0).astype(w3_ref.dtype)      # (TB, 128)
    h = jnp.dot(h, w3_ref[...], preferred_element_type=jnp.float32) + b3_ref[...]
    h = jnp.maximum(h, 0.0).astype(w4_ref.dtype)      # (TB, 128)
    out = jnp.dot(h, w4_ref[...], preferred_element_type=jnp.float32) + b4_ref[...]
    o_ref[...] = out.astype(o_ref.dtype)              # lane-dense (TB, 128) store


# ---------------------------------------------------------------------------
# Host-side parameter prep: zero-pad to lane multiples, cast weights to bf16.
# ---------------------------------------------------------------------------
def pad_and_cast_params(params, compute_dtype=jnp.bfloat16):
    (w1, b1), (w2, b2), (w3, b3), (w4, b4) = params
    w1p = _pad2(w1, (F_IN, LANE)).astype(compute_dtype)
    w2p = _pad2(w2, (LANE, LANE)).astype(compute_dtype)
    w3p = _pad2(w3, (LANE, LANE)).astype(compute_dtype)
    w4p = _pad2(w4, (LANE, LANE)).astype(compute_dtype)
    b1p = _pad2(b1, (1, LANE))   # biases stay f32 (added to f32 accumulators)
    b2p = _pad2(b2, (1, LANE))
    b3p = _pad2(b3, (1, LANE))
    b4p = _pad2(b4, (1, LANE))
    return (w1p, b1p), (w2p, b2p), (w3p, b3p), (w4p, b4p)


# ---------------------------------------------------------------------------
# Wrapper: batch-tiled pallas_call.
# ---------------------------------------------------------------------------
@functools.partial(jax.jit, static_argnames=("tb",))
def mlp_regression_forward(x, padded_params, tb=128):
    """x: (B, 8) float32. Returns (B,) float32."""
    (w1, b1), (w2, b2), (w3, b3), (w4, b4) = padded_params
    B = x.shape[0]

    # Batch tile: multiple of 8 sublanes; pad batch so the grid divides evenly.
    tb = min(tb, _round_up(B, 8))
    B_pad = _round_up(B, tb)
    if B_pad != B:
        x = jnp.pad(x, ((0, B_pad - B), (0, 0)))
    x = x.astype(w1.dtype)

    grid = (B_pad // tb,)
    const = lambda i: (0, 0)

    flops = 2 * B_pad * (F_IN * H1 + H1 * H2 + H2 * H3 + H3 * OUT)
    weight_bytes = sum(int(a.size) * a.dtype.itemsize
                       for a in (w1, b1, w2, b2, w3, b3, w4, b4))
    bytes_accessed = int(x.size) * x.dtype.itemsize + weight_bytes + B_pad * LANE * 4
    cost = pl.CostEstimate(flops=flops, transcendentals=0,
                           bytes_accessed=bytes_accessed)

    out = pl.pallas_call(
        mlp_kernel,
        out_shape=jax.ShapeDtypeStruct((B_pad, LANE), jnp.float32),
        grid=grid,
        in_specs=[
            pl.BlockSpec((tb, F_IN), lambda i: (i, 0)),        # x tile (pipelined)
            pl.BlockSpec(w1.shape, const), pl.BlockSpec(b1.shape, const),
            pl.BlockSpec(w2.shape, const), pl.BlockSpec(b2.shape, const),
            pl.BlockSpec(w3.shape, const), pl.BlockSpec(b3.shape, const),
            pl.BlockSpec(w4.shape, const), pl.BlockSpec(b4.shape, const),
        ],
        out_specs=pl.BlockSpec((tb, LANE), lambda i: (i, 0)),  # lane-dense output
        compiler_params=pltpu.CompilerParams(
            dimension_semantics=("parallel",)),                 # v7x dual-TC
        cost_estimate=cost,
    )(x, w1, b1, w2, b2, w3, b3, w4, b4)

    # output[:, 0] (glue, outside the kernel); drop any batch padding.
    return out[:B, 0]


# ---------------------------------------------------------------------------
# Init + reference.
# ---------------------------------------------------------------------------
def init_linear(key, fan_in, fan_out):
    kw, kb = jax.random.split(key)
    bound = 1.0 / math.sqrt(fan_in)
    w = jax.random.uniform(kw, (fan_in, fan_out), jnp.float32, -bound, bound)
    b = jax.random.uniform(kb, (1, fan_out), jnp.float32, -bound, bound)
    return w, b


def make_params(key):
    k1, k2, k3, k4 = jax.random.split(key, 4)
    return (
        init_linear(k1, F_IN, H1),
        init_linear(k2, H1, H2),
        init_linear(k3, H2, H3),
        init_linear(k4, H3, OUT),
    )


def reference_forward(x, params, compute_dtype=jnp.bfloat16):
    """Pure-JAX reference using the same bf16 weights / f32 accumulation."""
    (w1, b1), (w2, b2), (w3, b3), (w4, b4) = params
    h = x.astype(compute_dtype)
    h = jnp.dot(h, w1.astype(compute_dtype), preferred_element_type=jnp.float32) + b1
    h = jnp.maximum(h, 0.0).astype(compute_dtype)
    h = jnp.dot(h, w2.astype(compute_dtype), preferred_element_type=jnp.float32) + b2
    h = jnp.maximum(h, 0.0).astype(compute_dtype)
    h = jnp.dot(h, w3.astype(compute_dtype), preferred_element_type=jnp.float32) + b3
    h = jnp.maximum(h, 0.0).astype(compute_dtype)
    out = jnp.dot(h, w4.astype(compute_dtype), preferred_element_type=jnp.float32) + b4
    return out[:, 0]


if __name__ == "__main__":
    key = jax.random.PRNGKey(0)
    kx, kp = jax.random.split(key)

    B = 256  # small demo batch; grid of 2 tiles at TB=128
    x = jax.random.normal(kx, (B, F_IN), jnp.float32)
    params = make_params(kp)
    padded_params = pad_and_cast_params(params)

    y = mlp_regression_forward(x, padded_params, tb=128)
    y = jax.block_until_ready(y)

    y_ref = reference_forward(x, params)
    assert y.shape == (B,)
    assert jnp.allclose(y, y_ref, atol=1e-4, rtol=1e-3), (
        float(jnp.max(jnp.abs(y - y_ref))))

    print("KERNEL_OK")
</pallas_src>

<mosaic_0001>
module attributes {stable_mosaic.version = 11 : i64} {
  func.func @mlp_kernel(%arg0: i32, %arg1: memref<128x8xbf16, #tpu.memory_space<vmem>>, %arg2: memref<8x128xbf16, #tpu.memory_space<vmem>>, %arg3: memref<1x128xf32, #tpu.memory_space<vmem>>, %arg4: memref<128x128xbf16, #tpu.memory_space<vmem>>, %arg5: memref<1x128xf32, #tpu.memory_space<vmem>>, %arg6: memref<128x128xbf16, #tpu.memory_space<vmem>>, %arg7: memref<1x128xf32, #tpu.memory_space<vmem>>, %arg8: memref<128x128xbf16, #tpu.memory_space<vmem>>, %arg9: memref<1x128xf32, #tpu.memory_space<vmem>>, %arg10: memref<128x128xf32, #tpu.memory_space<vmem>>) attributes {dimension_semantics = [#tpu.dimension_semantics<parallel>], iteration_bounds = array<i64: 2>, scalar_prefetch = 0 : i64, scratch_operands = 0 : i64, tpu.core_type = #tpu.core_type<tc>, window_params = [{transform_indices = @transform_0, window_bounds = array<i64: 128, 8>}, {pipeline_mode = #tpu.pipeline_mode<synchronous>, transform_indices = @transform_1, window_bounds = array<i64: 8, 128>}, {pipeline_mode = #tpu.pipeline_mode<synchronous>, transform_indices = @transform_2, window_bounds = array<i64: 1, 128>}, {pipeline_mode = #tpu.pipeline_mode<synchronous>, transform_indices = @transform_3, window_bounds = array<i64: 128, 128>}, {pipeline_mode = #tpu.pipeline_mode<synchronous>, transform_indices = @transform_4, window_bounds = array<i64: 1, 128>}, {pipeline_mode = #tpu.pipeline_mode<synchronous>, transform_indices = @transform_5, window_bounds = array<i64: 128, 128>}, {pipeline_mode = #tpu.pipeline_mode<synchronous>, transform_indices = @transform_6, window_bounds = array<i64: 1, 128>}, {pipeline_mode = #tpu.pipeline_mode<synchronous>, transform_indices = @transform_7, window_bounds = array<i64: 128, 128>}, {pipeline_mode = #tpu.pipeline_mode<synchronous>, transform_indices = @transform_8, window_bounds = array<i64: 1, 128>}, {transform_indices = @transform_9, window_bounds = array<i64: 128, 128>}]} {
    %c0 = arith.constant 0 : index
    %c0_0 = arith.constant 0 : index
    %0 = vector.load %arg1[%c0, %c0_0] : memref<128x8xbf16, #tpu.memory_space<vmem>>, vector<128x8xbf16>
    %c0_1 = arith.constant 0 : index
    %c0_2 = arith.constant 0 : index
    %1 = vector.load %arg2[%c0_1, %c0_2] : memref<8x128xbf16, #tpu.memory_space<vmem>>, vector<8x128xbf16>
    %cst = arith.constant dense<0.000000e+00> : vector<128x128xf32>
    %2 = tpu.matmul %0, %1, %cst {dimension_numbers = #tpu.dot_dimension_numbers<[1], [0], [0], [1], [0, 0, 1, 1], [], []>} : vector<128x8xbf16>, vector<8x128xbf16>, vector<128x128xf32> -> vector<128x128xf32>
    %c0_3 = arith.constant 0 : index
    %c0_4 = arith.constant 0 : index
    %3 = vector.load %arg3[%c0_3, %c0_4] : memref<1x128xf32, #tpu.memory_space<vmem>>, vector<1x128xf32>
    %4 = vector.broadcast %3 : vector<1x128xf32> to vector<128x128xf32>
    %5 = arith.addf %2, %4 : vector<128x128xf32>
    %cst_5 = arith.constant 0.000000e+00 : f32
    %6 = vector.broadcast %cst_5 : f32 to vector<128x128xf32>
    %7 = arith.maximumf %5, %6 : vector<128x128xf32>
    %8 = arith.truncf %7 : vector<128x128xf32> to vector<128x128xbf16>
    %c0_6 = arith.constant 0 : index
    %c0_7 = arith.constant 0 : index
    %9 = vector.load %arg4[%c0_6, %c0_7] : memref<128x128xbf16, #tpu.memory_space<vmem>>, vector<128x128xbf16>
    %cst_8 = arith.constant dense<0.000000e+00> : vector<128x128xf32>
    %10 = tpu.matmul %8, %9, %cst_8 {dimension_numbers = #tpu.dot_dimension_numbers<[1], [0], [0], [1], [0, 0, 1, 1], [], []>} : vector<128x128xbf16>, vector<128x128xbf16>, vector<128x128xf32> -> vector<128x128xf32>
    %c0_9 = arith.constant 0 : index
    %c0_10 = arith.constant 0 : index
    %11 = vector.load %arg5[%c0_9, %c0_10] : memref<1x128xf32, #tpu.memory_space<vmem>>, vector<1x128xf32>
    %12 = vector.broadcast %11 : vector<1x128xf32> to vector<128x128xf32>
    %13 = arith.addf %10, %12 : vector<128x128xf32>
    %cst_11 = arith.constant 0.000000e+00 : f32
    %14 = vector.broadcast %cst_11 : f32 to vector<128x128xf32>
    %15 = arith.maximumf %13, %14 : vector<128x128xf32>
    %16 = arith.truncf %15 : vector<128x128xf32> to vector<128x128xbf16>
    %c0_12 = arith.constant 0 : index
    %c0_13 = arith.constant 0 : index
    %17 = vector.load %arg6[%c0_12, %c0_13] : memref<128x128xbf16, #tpu.memory_space<vmem>>, vector<128x128xbf16>
    %cst_14 = arith.constant dense<0.000000e+00> : vector<128x128xf32>
    %18 = tpu.matmul %16, %17, %cst_14 {dimension_numbers = #tpu.dot_dimension_numbers<[1], [0], [0], [1], [0, 0, 1, 1], [], []>} : vector<128x128xbf16>, vector<128x128xbf16>, vector<128x128xf32> -> vector<128x128xf32>
    %c0_15 = arith.constant 0 : index
    %c0_16 = arith.constant 0 : index
    %19 = vector.load %arg7[%c0_15, %c0_16] : memref<1x128xf32, #tpu.memory_space<vmem>>, vector<1x128xf32>
    %20 = vector.broadcast %19 : vector<1x128xf32> to vector<128x128xf32>
    %21 = arith.addf %18, %20 : vector<128x128xf32>
    %cst_17 = arith.constant 0.000000e+00 : f32
    %22 = vector.broadcast %cst_17 : f32 to vector<128x128xf32>
    %23 = arith.maximumf %21, %22 : vector<128x128xf32>
    %24 = arith.truncf %23 : vector<128x128xf32> to vector<128x128xbf16>
    %c0_18 = arith.constant 0 : index
    %c0_19 = arith.constant 0 : index
    %25 = vector.load %arg8[%c0_18, %c0_19] : memref<128x128xbf16, #tpu.memory_space<vmem>>, vector<128x128xbf16>
    %cst_20 = arith.constant dense<0.000000e+00> : vector<128x128xf32>
    %26 = tpu.matmul %24, %25, %cst_20 {dimension_numbers = #tpu.dot_dimension_numbers<[1], [0], [0], [1], [0, 0, 1, 1], [], []>} : vector<128x128xbf16>, vector<128x128xbf16>, vector<128x128xf32> -> vector<128x128xf32>
    %c0_21 = arith.constant 0 : index
    %c0_22 = arith.constant 0 : index
    %27 = vector.load %arg9[%c0_21, %c0_22] : memref<1x128xf32, #tpu.memory_space<vmem>>, vector<1x128xf32>
    %28 = vector.broadcast %27 : vector<1x128xf32> to vector<128x128xf32>
    %29 = arith.addf %26, %28 : vector<128x128xf32>
    %c0_23 = arith.constant 0 : index
    %c0_24 = arith.constant 0 : index
    %30 = vector.load %arg10[%c0_23, %c0_24] : memref<128x128xf32, #tpu.memory_space<vmem>>, vector<128x128xf32>
    tpu.vector_store %arg10[%c0_23, %c0_24], %29 {strides = array<i32>} : memref<128x128xf32, #tpu.memory_space<vmem>>, vector<128x128xf32>,
    return
  }
  func.func @transform_0(%arg0: i32) -> (i32, i32) {
    %c0_i32 = arith.constant 0 : i32
    %c0_i32_0 = arith.constant 0 : i32
    return %arg0, %c0_i32 : i32, i32
  }
  func.func @transform_1(%arg0: i32) -> (i32, i32) {
    %c0_i32 = arith.constant 0 : i32
    %c0_i32_0 = arith.constant 0 : i32
    %c0_i32_1 = arith.constant 0 : i32
    return %c0_i32, %c0_i32_0 : i32, i32
  }
  func.func @transform_2(%arg0: i32) -> (i32, i32) {
    %c0_i32 = arith.constant 0 : i32
    %c0_i32_0 = arith.constant 0 : i32
    %c0_i32_1 = arith.constant 0 : i32
    return %c0_i32, %c0_i32_0 : i32, i32
  }
  func.func @transform_3(%arg0: i32) -> (i32, i32) {
    %c0_i32 = arith.constant 0 : i32
    %c0_i32_0 = arith.constant 0 : i32
    %c0_i32_1 = arith.constant 0 : i32
    return %c0_i32, %c0_i32_0 : i32, i32
  }
  func.func @transform_4(%arg0: i32) -> (i32, i32) {
    %c0_i32 = arith.constant 0 : i32
    %c0_i32_0 = arith.constant 0 : i32
    %c0_i32_1 = arith.constant 0 : i32
    return %c0_i32, %c0_i32_0 : i32, i32
  }
  func.func @transform_5(%arg0: i32) -> (i32, i32) {
    %c0_i32 = arith.constant 0 : i32
    %c0_i32_0 = arith.constant 0 : i32
    %c0_i32_1 = arith.constant 0 : i32
    return %c0_i32, %c0_i32_0 : i32, i32
  }
  func.func @transform_6(%arg0: i32) -> (i32, i32) {
    %c0_i32 = arith.constant 0 : i32
    %c0_i32_0 = arith.constant 0 : i32
    %c0_i32_1 = arith.constant 0 : i32
    return %c0_i32, %c0_i32_0 : i32, i32
  }
  func.func @transform_7(%arg0: i32) -> (i32, i32) {
    %c0_i32 = arith.constant 0 : i32
    %c0_i32_0 = arith.constant 0 : i32
    %c0_i32_1 = arith.constant 0 : i32
    return %c0_i32, %c0_i32_0 : i32, i32
  }
  func.func @transform_8(%arg0: i32) -> (i32, i32) {
    %c0_i32 = arith.constant 0 : i32
    %c0_i32_0 = arith.constant 0 : i32
    %c0_i32_1 = arith.constant 0 : i32
    return %c0_i32, %c0_i32_0 : i32, i32
  }
  func.func @transform_9(%arg0: i32) -> (i32, i32) {
    %c0_i32 = arith.constant 0 : i32
    %c0_i32_0 = arith.constant 0 : i32
    return %arg0, %c0_i32 : i32, i32
  }
}

</mosaic_0001>

<llo_original>
// kernel: mlp_regression_forward.1
$region0: #{mlp_regression_forward.1}
  #allocation0 [shape = 'u32[]', space=smem, size = 0x4, offset = 0x4, fixed_abs, tag = 'smem constant byte address 0x4 - core index']
  #allocation1 [shape = 'u32[72,128]{1,0:T(1,128)}', space=vmem, size = 0x9000, scoped, tag = 'internal scratch']
  %s0 = inlined_call_operand.vmem [shape: bf16[256,8], index: 0, kind: input, shape index: {}]
  %s1 = inlined_call_operand.vmem [shape: bf16[8,128], index: 1, kind: input, shape index: {}]
  %s2 = inlined_call_operand.vmem [shape: f32[1,128], index: 2, kind: input, shape index: {}]
  %s3 = inlined_call_operand.vmem [shape: bf16[128,128], index: 3, kind: input, shape index: {}]
  %s4 = inlined_call_operand.vmem [shape: f32[1,128], index: 4, kind: input, shape index: {}]
  %s5 = inlined_call_operand.vmem [shape: bf16[128,128], index: 5, kind: input, shape index: {}]
  %s6 = inlined_call_operand.vmem [shape: f32[1,128], index: 6, kind: input, shape index: {}]
  %s7 = inlined_call_operand.hbm [shape: bf16[128,128], index: 7, kind: input, shape index: {}]
  %s8 = inlined_call_operand.vmem [shape: f32[1,128], index: 8, kind: input, shape index: {}]
  %s9 = inlined_call_operand.vmem [shape: f32[256,128], index: 9, kind: output, shape index: {}]
  %s10 = sld [smem:[#allocation0]]
  $region73: #{mlp_regression_forward.1} parent=0
    _
  %s12 = ssub.s32 1, %s10
  %s13 = scalar_select 0, %s12, %s10
  $region1: #{mlp_regression_forward.1} parent=0
    #allocation2 [shape = 'u8[32768]{0}', space=vmem, size = 0x8000, scoped, tag = 'input window, operand 7, single buffered']
    #allocation3 [shape = 's32[2]{0}', space=sflag, size = 0x8, scoped, tag = 'scoped memory for mlp_regression_forward.1']
    %14 = vsyncpa [#allocation3], 0
    loop: start=0, step=1, limit=4
    $region2: #{mlp_regression_forward.1} parent=1 // loop_pre_header
      _
    $region3: #{mlp_regression_forward.1} parent=1 // loop_header
      %s16 = sphi 0, %s20
      %p17 = scmp.ge.s32.totalorder %s16, 4
      %s26 = sphi 0, %s28
      %s29 = sphi 0, %s26
      %s30 = sphi 0, %s29
      %s46 = sphi 0, %s30
      %s50 = sphi 0, %s50
      %s52 = sphi 0, %s50
      %s53 = sphi 0, %s52
      %s67 = sphi 0, %s53
      %s71 = sphi 0, %s71
      %s73 = sphi 0, %s71
      %s74 = sphi 0, %s73
      %s88 = sphi 0, %s74
      %s92 = sphi 0, %s92
      %s94 = sphi 0, %s92
      %s95 = sphi 0, %s94
      %s109 = sphi 0, %s95
      %s113 = sphi 0, %s113
      %s115 = sphi 0, %s113
      %s116 = sphi 0, %s115
      %s130 = sphi 0, %s116
      %s134 = sphi 0, %s134
      %s136 = sphi 0, %s134
      %s137 = sphi 0, %s136
      %s151 = sphi 0, %s137
      %s155 = sphi 0, %s155
      %s157 = sphi 0, %s155
      %s158 = sphi 0, %s157
      %s172 = sphi 0, %s158
      %s176 = sphi 0, %s176
      %s178 = sphi 0, %s176
      %s179 = sphi 0, %s178
      %s193 = sphi 0, %s179
      %s197 = sphi 0, %s197
      %s199 = sphi 0, %s197
      %s200 = sphi 0, %s199
      %s214 = sphi 0, %s200
      %s220 = sphi 0, %s222
      %s223 = sphi 0, %s220
      %s224 = sphi 0, %s223
      %s240 = sphi 0, %s224
    $region4: #{mlp_regression_forward.1} parent=1 // loop_header_branch
      %19 = sbr.rel (%p17) target = $region8
    $region5: #{mlp_regression_forward.1} parent=1 // loop_body
      %s21 = ssub.s32 %s16, 1
      %s22 = ssub.s32 %s16, 2
      %s23 = sadd.s32 %s16, 1
      %s24 = ssub.s32 %s16, %s23
      %p25 = scmp.eq.s32.totalorder %s24, 0
      %s27 = sadd.s32 %s26, 1
      %s28 = scalar_select %p25, %s26, %s27
      %p31 = pneg %p25
      %p32 = scmp.eq.s32.totalorder %s16, 1
      %p33 = por %p31, %p32
      %p34 = scmp.ne.s32.totalorder %s26, %s29
      %p35 = scmp.eq.s32.totalorder %s16, 0
      %p36 = por %p34, %p35
      %p37 = scmp.ne.s32.totalorder %s26, %s29
      %p38 = scmp.eq.s32.totalorder %s21, 1
      %p39 = por %p37, %p38
      %p40 = scmp.ne.s32.totalorder %s29, %s30
      %p41 = scmp.eq.s32.totalorder %s21, 0
      %p42 = por %p40, %p41
      %p43 = scmp.ne.s32.totalorder %s29, %s30
      %p44 = scmp.eq.s32.totalorder %s22, 1
      %p45 = por %p43, %p44
      %p47 = scmp.ne.s32.totalorder %s30, %s46
      %p48 = scmp.eq.s32.totalorder %s22, 0
      %p49 = por %p47, %p48
      %s51 = sadd.s32 %s50, 1
      %p54 = scmp.eq.s32.totalorder %s16, 1
      %p55 = scmp.ne.s32.totalorder %s50, %s52
      %p56 = scmp.eq.s32.totalorder %s16, 0
      %p57 = por %p55, %p56
      %p58 = scmp.ne.s32.totalorder %s50, %s52
      %p59 = scmp.eq.s32.totalorder %s21, 1
      %p60 = por %p58, %p59
      %p61 = scmp.ne.s32.totalorder %s52, %s53
      %p62 = scmp.eq.s32.totalorder %s21, 0
      %p63 = por %p61, %p62
      %p64 = scmp.ne.s32.totalorder %s52, %s53
      %p65 = scmp.eq.s32.totalorder %s22, 1
      %p66 = por %p64, %p65
      %p68 = scmp.ne.s32.totalorder %s53, %s67
      %p69 = scmp.eq.s32.totalorder %s22, 0
      %p70 = por %p68, %p69
      %s72 = sadd.s32 %s71, 1
      %p75 = scmp.eq.s32.totalorder %s16, 1
      %p76 = scmp.ne.s32.totalorder %s71, %s73
      %p77 = scmp.eq.s32.totalorder %s16, 0
      %p78 = por %p76, %p77
      %p79 = scmp.ne.s32.totalorder %s71, %s73
      %p80 = scmp.eq.s32.totalorder %s21, 1
      %p81 = por %p79, %p80
      %p82 = scmp.ne.s32.totalorder %s73, %s74
      %p83 = scmp.eq.s32.totalorder %s21, 0
      %p84 = por %p82, %p83
      %p85 = scmp.ne.s32.totalorder %s73, %s74
      %p86 = scmp.eq.s32.totalorder %s22, 1
      %p87 = por %p85, %p86
      %p89 = scmp.ne.s32.totalorder %s74, %s88
      %p90 = scmp.eq.s32.totalorder %s22, 0
      %p91 = por %p89, %p90
      %s93 = sadd.s32 %s92, 1
      %p96 = scmp.eq.s32.totalorder %s16, 1
      %p97 = scmp.ne.s32.totalorder %s92, %s94
      %p98 = scmp.eq.s32.totalorder %s16, 0
      %p99 = por %p97, %p98
      %p100 = scmp.ne.s32.totalorder %s92, %s94
      %p101 = scmp.eq.s32.totalorder %s21, 1
      %p102 = por %p100, %p101
      %p103 = scmp.ne.s32.totalorder %s94, %s95
      %p104 = scmp.eq.s32.totalorder %s21, 0
      %p105 = por %p103, %p104
      %p106 = scmp.ne.s32.totalorder %s94, %s95
      %p107 = scmp.eq.s32.totalorder %s22, 1
      %p108 = por %p106, %p107
      %p110 = scmp.ne.s32.totalorder %s95, %s109
      %p111 = scmp.eq.s32.totalorder %s22, 0
      %p112 = por %p110, %p111
      %s114 = sadd.s32 %s113, 1
      %p117 = scmp.eq.s32.totalorder %s16, 1
      %p118 = scmp.ne.s32.totalorder %s113, %s115
      %p119 = scmp.eq.s32.totalorder %s16, 0
      %p120 = por %p118, %p119
      %p121 = scmp.ne.s32.totalorder %s113, %s115
      %p122 = scmp.eq.s32.totalorder %s21, 1
      %p123 = por %p121, %p122
      %p124 = scmp.ne.s32.totalorder %s115, %s116
      %p125 = scmp.eq.s32.totalorder %s21, 0
      %p126 = por %p124, %p125
      %p127 = scmp.ne.s32.totalorder %s115, %s116
      %p128 = scmp.eq.s32.totalorder %s22, 1
      %p129 = por %p127, %p128
      %p131 = scmp.ne.s32.totalorder %s116, %s130
      %p132 = scmp.eq.s32.totalorder %s22, 0
      %p133 = por %p131, %p132
      %s135 = sadd.s32 %s134, 1
      %p138 = scmp.eq.s32.totalorder %s16, 1
      %p139 = scmp.ne.s32.totalorder %s134, %s136
      %p140 = scmp.eq.s32.totalorder %s16, 0
      %p141 = por %p139, %p140
      %p142 = scmp.ne.s32.totalorder %s134, %s136
      %p143 = scmp.eq.s32.totalorder %s21, 1
      %p144 = por %p142, %p143
      %p145 = scmp.ne.s32.totalorder %s136, %s137
      %p146 = scmp.eq.s32.totalorder %s21, 0
      %p147 = por %p145, %p146
      %p148 = scmp.ne.s32.totalorder %s136, %s137
      %p149 = scmp.eq.s32.totalorder %s22, 1
      %p150 = por %p148, %p149
      %p152 = scmp.ne.s32.totalorder %s137, %s151
      %p153 = scmp.eq.s32.totalorder %s22, 0
      %p154 = por %p152, %p153
      %s156 = sadd.s32 %s155, 1
      %p159 = scmp.eq.s32.totalorder %s16, 1
      %p160 = scmp.ne.s32.totalorder %s155, %s157
      %p161 = scmp.eq.s32.totalorder %s16, 0
      %p162 = por %p160, %p161
      %p163 = scmp.ne.s32.totalorder %s155, %s157
      %p164 = scmp.eq.s32.totalorder %s21, 1
      %p165 = por %p163, %p164
      %p166 = scmp.ne.s32.totalorder %s157, %s158
      %p167 = scmp.eq.s32.totalorder %s21, 0
      %p168 = por %p166, %p167
      %p169 = scmp.ne.s32.totalorder %s157, %s158
      %p170 = scmp.eq.s32.totalorder %s22, 1
      %p171 = por %p169, %p170
      %p173 = scmp.ne.s32.totalorder %s158, %s172
      %p174 = scmp.eq.s32.totalorder %s22, 0
      %p175 = por %p173, %p174
      %s177 = sadd.s32 %s176, 1
      %p180 = scmp.eq.s32.totalorder %s16, 1
      %p181 = scmp.ne.s32.totalorder %s176, %s178
      %p182 = scmp.eq.s32.totalorder %s16, 0
      %p183 = por %p181, %p182
      %p184 = scmp.ne.s32.totalorder %s176, %s178
      %p185 = scmp.eq.s32.totalorder %s21, 1
      %p186 = por %p184, %p185
      %p187 = scmp.ne.s32.totalorder %s178, %s179
      %p188 = scmp.eq.s32.totalorder %s21, 0
      %p189 = por %p187, %p188
      %p190 = scmp.ne.s32.totalorder %s178, %s179
      %p191 = scmp.eq.s32.totalorder %s22, 1
      %p192 = por %p190, %p191
      %p194 = scmp.ne.s32.totalorder %s179, %s193
      %p195 = scmp.eq.s32.totalorder %s22, 0
      %p196 = por %p194, %p195
      %s198 = sadd.s32 %s197, 1
      %p201 = scmp.eq.s32.totalorder %s16, 1
      %p202 = scmp.ne.s32.totalorder %s197, %s199
      %p203 = scmp.eq.s32.totalorder %s16, 0
      %p204 = por %p202, %p203
      %p205 = scmp.ne.s32.totalorder %s197, %s199
      %p206 = scmp.eq.s32.totalorder %s21, 1
      %p207 = por %p205, %p206
      %p208 = scmp.ne.s32.totalorder %s199, %s200
      %p209 = scmp.eq.s32.totalorder %s21, 0
      %p210 = por %p208, %p209
      %p211 = scmp.ne.s32.totalorder %s199, %s200
      %p212 = scmp.eq.s32.totalorder %s22, 1
      %p213 = por %p211, %p212
      %p215 = scmp.ne.s32.totalorder %s200, %s214
      %p216 = scmp.eq.s32.totalorder %s22, 0
      %p217 = por %p215, %p216
      %s218 = ssub.s32 %s16, %s23
      %p219 = scmp.eq.s32.totalorder %s218, 0
      %s221 = sadd.s32 %s220, 1
      %s222 = scalar_select %p219, %s220, %s221
      %p225 = pneg %p219
      %p226 = scmp.eq.s32.totalorder %s16, 1
      %p227 = por %p225, %p226
      %p228 = scmp.ne.s32.totalorder %s220, %s223
      %p229 = scmp.eq.s32.totalorder %s16, 0
      %p230 = por %p228, %p229
      %p231 = scmp.ne.s32.totalorder %s220, %s223
      %p232 = scmp.eq.s32.totalorder %s21, 1
      %p233 = por %p231, %p232
      %p234 = scmp.ne.s32.totalorder %s223, %s224
      %p235 = scmp.eq.s32.totalorder %s21, 0
      %p236 = por %p234, %p235
      %p237 = scmp.ne.s32.totalorder %s223, %s224
      %p238 = scmp.eq.s32.totalorder %s22, 1
      %p239 = por %p237, %p238
      %p241 = scmp.ne.s32.totalorder %s224, %s240
      %p242 = scmp.eq.s32.totalorder %s22, 0
      %p243 = por %p241, %p242
      %p244 = scmp.le.s32.totalorder 1, %s16
      %p245 = scmp.lt.s32.totalorder %s16, 3
      %p246 = pnand %p244, %p245
      %p247 = pneg %p246
      // Predicated region
      $region9: #{mlp_regression_forward.1} parent=5 // pred_check
        _
      $region10: #{mlp_regression_forward.1} parent=5 // pred_check_branch
        %249 = sbr.rel (%p246) target = $region12
      $region11: #{mlp_regression_forward.1} parent=5 // pred_region
        %s250 = ssub.s32 %s16, 1
        // Predicated region
        $region13: #{mlp_regression_forward.1} parent=11 // pred_check
          %p251 = pneg %p63
        $region14: #{mlp_regression_forward.1} parent=11 // pred_check_branch
          %253 = sbr.rel (%p251) target = $region16
        $region15: #{mlp_regression_forward.1} parent=11 // pred_region
          _
        $region16: #{mlp_regression_forward.1} parent=11 // pred_fallthru
          _
        // Predicated region
        $region17: #{mlp_regression_forward.1} parent=11 // pred_check
          %p254 = pneg %p84
        $region18: #{mlp_regression_forward.1} parent=11 // pred_check_branch
          %256 = sbr.rel (%p254) target = $region20
        $region19: #{mlp_regression_forward.1} parent=11 // pred_region
          _
        $region20: #{mlp_regression_forward.1} parent=11 // pred_fallthru
          _
        // Predicated region
        $region21: #{mlp_regression_forward.1} parent=11 // pred_check
          %p257 = pneg %p105
        $region22: #{mlp_regression_forward.1} parent=11 // pred_check_branch
          %259 = sbr.rel (%p257) target = $region24
        $region23: #{mlp_regression_forward.1} parent=11 // pred_region
          _
        $region24: #{mlp_regression_forward.1} parent=11 // pred_fallthru
          _
        // Predicated region
        $region25: #{mlp_regression_forward.1} parent=11 // pred_check
          %p260 = pneg %p126
        $region26: #{mlp_regression_forward.1} parent=11 // pred_check_branch
          %262 = sbr.rel (%p260) target = $region28
        $region27: #{mlp_regression_forward.1} parent=11 // pred_region
          _
        $region28: #{mlp_regression_forward.1} parent=11 // pred_fallthru
          _
        // Predicated region
        $region29: #{mlp_regression_forward.1} parent=11 // pred_check
          %p263 = pneg %p147
        $region30: #{mlp_regression_forward.1} parent=11 // pred_check_branch
          %265 = sbr.rel (%p263) target = $region32
        $region31: #{mlp_regression_forward.1} parent=11 // pred_region
          _
        $region32: #{mlp_regression_forward.1} parent=11 // pred_fallthru
          _
        // Predicated region
        $region33: #{mlp_regression_forward.1} parent=11 // pred_check
          %p266 = pneg %p168
        $region34: #{mlp_regression_forward.1} parent=11 // pred_check_branch
          %268 = sbr.rel (%p266) target = $region36
        $region35: #{mlp_regression_forward.1} parent=11 // pred_region
          _
        $region36: #{mlp_regression_forward.1} parent=11 // pred_fallthru
          _
        // Predicated region
        $region37: #{mlp_regression_forward.1} parent=11 // pred_check
          %p269 = pneg %p189
        $region38: #{mlp_regression_forward.1} parent=11 // pred_check_branch
          %271 = sbr.rel (%p269) target = $region40
        $region39: #{mlp_regression_forward.1} parent=11 // pred_region
          %273 = vsyncadd [#allocation3], 0
          %s274 = sshll.u32 %s7, 4
          %s275 = int_to_ptr.hbm [resolvable:$true] %s274
          %s276 = sshll.u32 [#allocation2], 4
          %s277 = int_to_ptr.vmem [resolvable:$true] %s276
          %282 = dma.hbm_to_vmem [thread:$0]  %s275, 1024, %s277, [#allocation3], 64, 64, 4
        $region40: #{mlp_regression_forward.1} parent=11 // pred_fallthru
          _
        // Predicated region
        $region41: #{mlp_regression_forward.1} parent=11 // pred_check
          %p283 = pneg %p210
        $region42: #{mlp_regression_forward.1} parent=11 // pred_check_branch
          %285 = sbr.rel (%p283) target = $region44
        $region43: #{mlp_regression_forward.1} parent=11 // pred_region
          _
        $region44: #{mlp_regression_forward.1} parent=11 // pred_fallthru
          _
      $region12: #{mlp_regression_forward.1} parent=5 // pred_fallthru
        _
      %p286 = scmp.lt.s32.totalorder %s16, 2
      // Predicated region
      $region45: #{mlp_regression_forward.1} parent=5 // pred_check
        %p287 = pneg %p286
      $region46: #{mlp_regression_forward.1} parent=5 // pred_check_branch
        %289 = sbr.rel (%p287) target = $region48
      $region47: #{mlp_regression_forward.1} parent=5 // pred_region
        // Predicated region
        $region49: #{mlp_regression_forward.1} parent=47 // pred_check
          %p290 = pneg %p36
        $region50: #{mlp_regression_forward.1} parent=47 // pred_check_branch
          %292 = sbr.rel (%p290) target = $region52
        $region51: #{mlp_regression_forward.1} parent=47 // pred_region
          %s293 = smul.u32 16, %s16
          %p294 = scmp.lt.s32.totalorder %s293, 31
          %s295 = scalar_select %p294, %s293, 31
          %s296 = smul.addr %s295, 4
          %s297 = scalar_lea.vmem %s0, %s296
          %s298 = smul.u32 16, %s16
        $region52: #{mlp_regression_forward.1} parent=47 // pred_fallthru
          _
      $region48: #{mlp_regression_forward.1} parent=5 // pred_fallthru
        _
      %p299 = scmp.le.s32.totalorder 1, %s16
      %p300 = scmp.lt.s32.totalorder %s16, 3
      %p301 = pnand %p299, %p300
      %p302 = pneg %p301
      // Predicated region
      $region53: #{mlp_regression_forward.1} parent=5 // pred_check
        _
      $region54: #{mlp_regression_forward.1} parent=5 // pred_check_branch
        %304 = sbr.rel (%p301) target = $region56
      $region55: #{mlp_regression_forward.1} parent=5 // pred_region
        %s305 = ssub.s32 %s16, 1
        // Predicated region
        $region57: #{mlp_regression_forward.1} parent=55 // pred_check
          %p306 = pneg %p189
        $region58: #{mlp_regression_forward.1} parent=55 // pred_check_branch
          %308 = sbr.rel (%p306) target = $region60
        $region59: #{mlp_regression_forward.1} parent=55 // pred_region
          %310 = dma.done [#allocation3], 1024
        $region60: #{mlp_regression_forward.1} parent=55 // pred_fallthru
          _
        %s311 = smul.u32 16, %s21
        %p312 = scmp.lt.s32.totalorder %s311, 31
        %s313 = scalar_select %p312, %s311, 31
        %s314 = smul.addr %s313, 4
        %s315 = scalar_lea.vmem %s0, %s314
        %p316 = pneg %p42
        %p317 = pneg %p39
        %p318 = pneg %p63
        %p319 = pneg %p60
        %p320 = pneg %p84
        %p321 = pneg %p81
        %p322 = pneg %p105
        %p323 = pneg %p102
        %p324 = pneg %p126
        %p325 = pneg %p123
        %p326 = pneg %p147
        %p327 = pneg %p144
        %p328 = pneg %p168
        %p329 = pneg %p165
        %p330 = pneg %p189
        %p331 = pneg %p186
        %p332 = pneg %p210
        %p333 = pneg %p207
        %p334 = pneg %p236
        %p335 = pneg %p233
        %s336 = smul.u32 16, %s21
        %p337 = scmp.lt.s32.totalorder %s336, 31
        %s338 = scalar_select %p337, %s336, 31
        %s339 = smul.addr %s338, 8
        %s340 = scalar_lea.vmem %s9, %s339
        %s341 = smul.u32 16, %s21
        %p342 = scmp.lt.s32.totalorder %s341, 31
        %s343 = scalar_select %p342, %s341, 31
        %s344 = smul.addr %s343, 4
        %s345 = scalar_lea.vmem %s0, %s344
        %s346 = smul.u32 16, %s21
        %s347 = smul.u32 16, %s21
        %p348 = scmp.lt.s32.totalorder %s347, 31
        %s349 = scalar_select %p348, %s347, 31
        %s350 = smul.addr %s349, 8
        %s351 = scalar_lea.vmem %s9, %s350
        %s352 = smul.u32 16, %s21
        %v354 = vld [vmem:[%s345] sm:$0xf]
        %v355 = vld [vmem:[%s345 + $0x4] sm:$0xf]
        %v356 = vld [vmem:[%s345 + $0x8] sm:$0xf]
        %v357 = vld [vmem:[%s345 + $0xc] sm:$0xf]
        %v358 = vld [vmem:[%s345 + $0x10] sm:$0xf]
        %v359 = vld [vmem:[%s345 + $0x14] sm:$0xf]
        %v360 = vld [vmem:[%s345 + $0x18] sm:$0xf]
        %v361 = vld [vmem:[%s345 + $0x1c] sm:$0xf]
        %v362 = vld [vmem:[%s345 + $0x20] sm:$0xf]
        %v363 = vld [vmem:[%s345 + $0x24] sm:$0xf]
        %v364 = vld [vmem:[%s345 + $0x28] sm:$0xf]
        %v365 = vld [vmem:[%s345 + $0x2c] sm:$0xf]
        %v366 = vld [vmem:[%s345 + $0x30] sm:$0xf]
        %v367 = vld [vmem:[%s345 + $0x34] sm:$0xf]
        %v368 = vld [vmem:[%s345 + $0x38] sm:$0xf]
        %v369 = vld [vmem:[%s345 + $0x3c] sm:$0xf]
        %v370 = vld [vmem:[%s1] sm:$0xf]
        %v371 = vld [vmem:[%s2] sm:$0x1]
        %v373 = vperm.slane %v371, 0
        %v391 = vunpack.c.l.b16 %v354
        %v392 = vunpack.c.l.b16 %v355
        %v393 = vunpack.c.l.b16 %v356
        %v394 = vunpack.c.l.b16 %v357
        %v395 = vunpack.c.l.b16 %v358
        %v396 = vunpack.c.l.b16 %v359
        %v397 = vunpack.c.l.b16 %v360
        %v398 = vunpack.c.l.b16 %v361
        %v399 = vunpack.c.l.b16 %v362
        %v400 = vunpack.c.l.b16 %v363
        %v401 = vunpack.c.l.b16 %v364
        %v402 = vunpack.c.l.b16 %v365
        %v403 = vunpack.c.l.b16 %v366
        %v404 = vunpack.c.l.b16 %v367
        %v405 = vunpack.c.l.b16 %v368
        %v406 = vunpack.c.l.b16 %v369
        %v407 = vpack.c.b16 %v392, %v391
        %v408 = vpack.c.b16 %v394, %v393
        %v409 = vpack.c.b16 %v396, %v395
        %v410 = vpack.c.b16 %v398, %v397
        %v411 = vpack.c.b16 %v400, %v399
        %v412 = vpack.c.b16 %v402, %v401
        %v413 = vpack.c.b16 %v404, %v403
        %v414 = vpack.c.b16 %v406, %v405
        %vm415 = vcmask 64512
        %v417 = vsel %vm415, %v407, 0
        %v420 = vsel %vm415, %v408, 0
        %v423 = vsel %vm415, %v409, 0
        %v426 = vsel %vm415, %v410, 0
        %v429 = vsel %vm415, %v411, 0
        %v432 = vsel %vm415, %v412, 0
        %v435 = vsel %vm415, %v413, 0
        %v438 = vsel %vm415, %v414, 0
        %vm440 = vcmask 1043456
        %v442 = vsel %vm440, %v370, 0
        %444 = vmatpush.bf16.msra.mxu0 0
        %445 = vmatpush.bf16.msra.mxu0 0
        %446 = vmatpush.bf16.msra.mxu0 0
        %447 = vmatpush.bf16.msra.mxu0 0
        %448 = vmatpush.bf16.msra.mxu0 0
        %449 = vmatpush.bf16.msra.mxu0 0
        %450 = vmatpush.bf16.msra.mxu0 0
        %451 = vmatpush.bf16.msra.mxu0 %v442
        %452 = vmatmul.bf16.gmra.mxu0 %v417
        %v453 = vpop.f32.mrf.mxu0
        %v454 = vadd.f32 %v373, %v453
        %v455 = vpop.f32.mrf.mxu0
        %v456 = vadd.f32 %v373, %v455
        %457 = vmatmul.bf16.gmra.mxu0 %v420
        %v458 = vpop.f32.mrf.mxu0
        %v459 = vadd.f32 %v373, %v458
        %v460 = vpop.f32.mrf.mxu0
        %v461 = vadd.f32 %v373, %v460
        %462 = vmatmul.bf16.gmra.mxu0 %v423
        %v463 = vpop.f32.mrf.mxu0
        %v464 = vadd.f32 %v373, %v463
        %v465 = vpop.f32.mrf.mxu0
        %v466 = vadd.f32 %v373, %v465
        %467 = vmatmul.bf16.gmra.mxu0 %v426
        %v468 = vpop.f32.mrf.mxu0
        %v469 = vadd.f32 %v373, %v468
        %v470 = vpop.f32.mrf.mxu0
        %v471 = vadd.f32 %v373, %v470
        %472 = vmatmul.bf16.gmra.mxu0 %v429
        %v473 = vpop.f32.mrf.mxu0
        %v474 = vadd.f32 %v373, %v473
        %v475 = vpop.f32.mrf.mxu0
        %v476 = vadd.f32 %v373, %v475
        %477 = vmatmul.bf16.gmra.mxu0 %v432
        %v478 = vpop.f32.mrf.mxu0
        %v479 = vadd.f32 %v373, %v478
        %v480 = vpop.f32.mrf.mxu0
        %v481 = vadd.f32 %v373, %v480
        %482 = vmatmul.bf16.gmra.mxu0 %v435
        %v483 = vpop.f32.mrf.mxu0
        %v484 = vadd.f32 %v373, %v483
        %v485 = vpop.f32.mrf.mxu0
        %v486 = vadd.f32 %v373, %v485
        %487 = vmatmul.bf16.gmra.mxu0 %v438
        %v488 = vpop.f32.mrf.mxu0
        %v489 = vadd.f32 %v373, %v488
        %v490 = vpop.f32.mrf.mxu0
        %v491 = vadd.f32 %v373, %v490
        %492 = vdwg.mxu0
        %v493 = vmax.f32 %v454, 0.0
        %v494 = vmax.f32 %v456, 0.0
        %v495 = vmax.f32 %v459, 0.0
        %v496 = vmax.f32 %v461, 0.0
        %v497 = vmax.f32 %v464, 0.0
        %v498 = vmax.f32 %v466, 0.0
        %v499 = vmax.f32 %v469, 0.0
        %v500 = vmax.f32 %v471, 0.0
        %v501 = vmax.f32 %v474, 0.0
        %v502 = vmax.f32 %v476, 0.0
        %v503 = vmax.f32 %v479, 0.0
        %v504 = vmax.f32 %v481, 0.0
        %v505 = vmax.f32 %v484, 0.0
        %v506 = vmax.f32 %v486, 0.0
        %v507 = vmax.f32 %v489, 0.0
        %v508 = vmax.f32 %v491, 0.0
        %v509 = vpack.c.bf16 %v494, %v493
        %v510 = vpack.c.bf16 %v496, %v495
        %v511 = vpack.c.bf16 %v498, %v497
        %v512 = vpack.c.bf16 %v500, %v499
        %v513 = vpack.c.bf16 %v502, %v501
        %v514 = vpack.c.bf16 %v504, %v503
        %v515 = vpack.c.bf16 %v506, %v505
        %v516 = vpack.c.bf16 %v508, %v507
        %v517 = vld [vmem:[%s3] sm:$0xf]
        %v518 = vld [vmem:[%s3 + $0x4] sm:$0xf]
        %v519 = vld [vmem:[%s3 + $0x8] sm:$0xf]
        %v520 = vld [vmem:[%s3 + $0xc] sm:$0xf]
        %v521 = vld [vmem:[%s3 + $0x10] sm:$0xf]
        %v522 = vld [vmem:[%s3 + $0x14] sm:$0xf]
        %v523 = vld [vmem:[%s3 + $0x18] sm:$0xf]
        %v524 = vld [vmem:[%s3 + $0x1c] sm:$0xf]
        %v525 = vld [vmem:[%s3 + $0x20] sm:$0xf]
        %v526 = vld [vmem:[%s3 + $0x24] sm:$0xf]
        %v527 = vld [vmem:[%s3 + $0x28] sm:$0xf]
        %v528 = vld [vmem:[%s3 + $0x2c] sm:$0xf]
        %v529 = vld [vmem:[%s3 + $0x30] sm:$0xf]
        %v530 = vld [vmem:[%s3 + $0x34] sm:$0xf]
        %v531 = vld [vmem:[%s3 + $0x38] sm:$0xf]
        %v532 = vld [vmem:[%s3 + $0x3c] sm:$0xf]
        %v533 = vld [vmem:[%s4] sm:$0x1]
        %v535 = vperm.slane %v533, 0
        %v553 = vunpack.c.l.b16 %v517
        %v554 = vunpack.c.l.b16 %v518
        %v555 = vunpack.c.l.b16 %v519
        %v556 = vunpack.c.l.b16 %v520
        %v557 = vunpack.c.l.b16 %v521
        %v558 = vunpack.c.l.b16 %v522
        %v559 = vunpack.c.l.b16 %v523
        %v560 = vunpack.c.l.b16 %v524
        %v561 = vunpack.c.l.b16 %v525
        %v562 = vunpack.c.l.b16 %v526
        %v563 = vunpack.c.l.b16 %v527
        %v564 = vunpack.c.l.b16 %v528
        %v565 = vunpack.c.l.b16 %v529
        %v566 = vunpack.c.l.b16 %v530
        %v567 = vunpack.c.l.b16 %v531
        %v568 = vunpack.c.l.b16 %v532
        %v569 = vpack.c.b16 %v554, %v553
        %v570 = vpack.c.b16 %v556, %v555
        %v571 = vpack.c.b16 %v558, %v557
        %v572 = vpack.c.b16 %v560, %v559
        %v573 = vpack.c.b16 %v562, %v561
        %v574 = vpack.c.b16 %v564, %v563
        %v575 = vpack.c.b16 %v566, %v565
        %v576 = vpack.c.b16 %v568, %v567
        %585 = vmatpush.bf16.msra.mxu0 %v576
        %586 = vmatpush.bf16.msra.mxu0 %v575
        %587 = vmatpush.bf16.msra.mxu0 %v574
        %588 = vmatpush.bf16.msra.mxu0 %v573
        %589 = vmatpush.bf16.msra.mxu0 %v572
        %590 = vmatpush.bf16.msra.mxu0 %v571
        %591 = vmatpush.bf16.msra.mxu0 %v570
        %592 = vmatpush.bf16.msra.mxu0 %v569
        %593 = vmatmul.bf16.gmra.mxu0 %v509
        %v594 = vpop.f32.mrf.mxu0
        %v595 = vadd.f32 %v535, %v594
        %v596 = vpop.f32.mrf.mxu0
        %v597 = vadd.f32 %v535, %v596
        %598 = vmatmul.bf16.gmra.mxu0 %v510
        %v599 = vpop.f32.mrf.mxu0
        %v600 = vadd.f32 %v535, %v599
        %v601 = vpop.f32.mrf.mxu0
        %v602 = vadd.f32 %v535, %v601
        %603 = vmatmul.bf16.gmra.mxu0 %v511
        %v604 = vpop.f32.mrf.mxu0
        %v605 = vadd.f32 %v535, %v604
        %v606 = vpop.f32.mrf.mxu0
        %v607 = vadd.f32 %v535, %v606
        %608 = vmatmul.bf16.gmra.mxu0 %v512
        %v609 = vpop.f32.mrf.mxu0
        %v610 = vadd.f32 %v535, %v609
        %v611 = vpop.f32.mrf.mxu0
        %v612 = vadd.f32 %v535, %v611
        %613 = vmatmul.bf16.gmra.mxu0 %v513
        %v614 = vpop.f32.mrf.mxu0
        %v615 = vadd.f32 %v535, %v614
        %v616 = vpop.f32.mrf.mxu0
        %v617 = vadd.f32 %v535, %v616
        %618 = vmatmul.bf16.gmra.mxu0 %v514
        %v619 = vpop.f32.mrf.mxu0
        %v620 = vadd.f32 %v535, %v619
        %v621 = vpop.f32.mrf.mxu0
        %v622 = vadd.f32 %v535, %v621
        %623 = vmatmul.bf16.gmra.mxu0 %v515
        %v624 = vpop.f32.mrf.mxu0
        %v625 = vadd.f32 %v535, %v624
        %v626 = vpop.f32.mrf.mxu0
        %v627 = vadd.f32 %v535, %v626
        %628 = vmatmul.bf16.gmra.mxu0 %v516
        %v629 = vpop.f32.mrf.mxu0
        %v630 = vadd.f32 %v535, %v629
        %v631 = vpop.f32.mrf.mxu0
        %v632 = vadd.f32 %v535, %v631
        %633 = vdwg.mxu0
        %v634 = vmax.f32 %v595, 0.0
        %v635 = vmax.f32 %v597, 0.0
        %v636 = vmax.f32 %v600, 0.0
        %v637 = vmax.f32 %v602, 0.0
        %v638 = vmax.f32 %v605, 0.0
        %v639 = vmax.f32 %v607, 0.0
        %v640 = vmax.f32 %v610, 0.0
        %v641 = vmax.f32 %v612, 0.0
        %v642 = vmax.f32 %v615, 0.0
        %v643 = vmax.f32 %v617, 0.0
        %v644 = vmax.f32 %v620, 0.0
        %v645 = vmax.f32 %v622, 0.0
        %v646 = vmax.f32 %v625, 0.0
        %v647 = vmax.f32 %v627, 0.0
        %v648 = vmax.f32 %v630, 0.0
        %v649 = vmax.f32 %v632, 0.0
        %v650 = vpack.c.bf16 %v635, %v634
        %v651 = vpack.c.bf16 %v637, %v636
        %v652 = vpack.c.bf16 %v639, %v638
        %v653 = vpack.c.bf16 %v641, %v640
        %v654 = vpack.c.bf16 %v643, %v642
        %v655 = vpack.c.bf16 %v645, %v644
        %v656 = vpack.c.bf16 %v647, %v646
        %v657 = vpack.c.bf16 %v649, %v648
        %v658 = vld [vmem:[%s5] sm:$0xf]
        %v659 = vld [vmem:[%s5 + $0x4] sm:$0xf]
        %v660 = vld [vmem:[%s5 + $0x8] sm:$0xf]
        %v661 = vld [vmem:[%s5 + $0xc] sm:$0xf]
        %v662 = vld [vmem:[%s5 + $0x10] sm:$0xf]
        %v663 = vld [vmem:[%s5 + $0x14] sm:$0xf]
        %v664 = vld [vmem:[%s5 + $0x18] sm:$0xf]
        %v665 = vld [vmem:[%s5 + $0x1c] sm:$0xf]
        %v666 = vld [vmem:[%s5 + $0x20] sm:$0xf]
        %v667 = vld [vmem:[%s5 + $0x24] sm:$0xf]
        %v668 = vld [vmem:[%s5 + $0x28] sm:$0xf]
        %v669 = vld [vmem:[%s5 + $0x2c] sm:$0xf]
        %v670 = vld [vmem:[%s5 + $0x30] sm:$0xf]
        %v671 = vld [vmem:[%s5 + $0x34] sm:$0xf]
        %v672 = vld [vmem:[%s5 + $0x38] sm:$0xf]
        %v673 = vld [vmem:[%s5 + $0x3c] sm:$0xf]
        %v674 = vld [vmem:[%s6] sm:$0x1]
        %v676 = vperm.slane %v674, 0
        %v694 = vunpack.c.l.b16 %v658
        %v695 = vunpack.c.l.b16 %v659
        %v696 = vunpack.c.l.b16 %v660
        %v697 = vunpack.c.l.b16 %v661
        %v698 = vunpack.c.l.b16 %v662
        %v699 = vunpack.c.l.b16 %v663
        %v700 = vunpack.c.l.b16 %v664
        %v701 = vunpack.c.l.b16 %v665
        %v702 = vunpack.c.l.b16 %v666
        %v703 = vunpack.c.l.b16 %v667
        %v704 = vunpack.c.l.b16 %v668
        %v705 = vunpack.c.l.b16 %v669
        %v706 = vunpack.c.l.b16 %v670
        %v707 = vunpack.c.l.b16 %v671
        %v708 = vunpack.c.l.b16 %v672
        %v709 = vunpack.c.l.b16 %v673
        %v710 = vpack.c.b16 %v695, %v694
        %v711 = vpack.c.b16 %v697, %v696
        %v712 = vpack.c.b16 %v699, %v698
        %v713 = vpack.c.b16 %v701, %v700
        %v714 = vpack.c.b16 %v703, %v702
        %v715 = vpack.c.b16 %v705, %v704
        %v716 = vpack.c.b16 %v707, %v706
        %v717 = vpack.c.b16 %v709, %v708
        %726 = vmatpush.bf16.msra.mxu0 %v717
        %727 = vmatpush.bf16.msra.mxu0 %v716
        %728 = vmatpush.bf16.msra.mxu0 %v715
        %729 = vmatpush.bf16.msra.mxu0 %v714
        %730 = vmatpush.bf16.msra.mxu0 %v713
        %731 = vmatpush.bf16.msra.mxu0 %v712
        %732 = vmatpush.bf16.msra.mxu0 %v711
        %733 = vmatpush.bf16.msra.mxu0 %v710
        %734 = vmatmul.bf16.gmra.mxu0 %v650
        %v735 = vpop.f32.mrf.mxu0
        %v736 = vadd.f32 %v676, %v735
        %v737 = vpop.f32.mrf.mxu0
        %v738 = vadd.f32 %v676, %v737
        %739 = vmatmul.bf16.gmra.mxu0 %v651
        %v740 = vpop.f32.mrf.mxu0
        %v741 = vadd.f32 %v676, %v740
        %v742 = vpop.f32.mrf.mxu0
        %v743 = vadd.f32 %v676, %v742
        %744 = vmatmul.bf16.gmra.mxu0 %v652
        %v745 = vpop.f32.mrf.mxu0
        %v746 = vadd.f32 %v676, %v745
        %v747 = vpop.f32.mrf.mxu0
        %v748 = vadd.f32 %v676, %v747
        %749 = vmatmul.bf16.gmra.mxu0 %v653
        %v750 = vpop.f32.mrf.mxu0
        %v751 = vadd.f32 %v676, %v750
        %v752 = vpop.f32.mrf.mxu0
        %v753 = vadd.f32 %v676, %v752
        %754 = vmatmul.bf16.gmra.mxu0 %v654
        %v755 = vpop.f32.mrf.mxu0
        %v756 = vadd.f32 %v676, %v755
        %v757 = vpop.f32.mrf.mxu0
        %v758 = vadd.f32 %v676, %v757
        %759 = vmatmul.bf16.gmra.mxu0 %v655
        %v760 = vpop.f32.mrf.mxu0
        %v761 = vadd.f32 %v676, %v760
        %v762 = vpop.f32.mrf.mxu0
        %v763 = vadd.f32 %v676, %v762
        %764 = vmatmul.bf16.gmra.mxu0 %v656
        %v765 = vpop.f32.mrf.mxu0
        %v766 = vadd.f32 %v676, %v765
        %v767 = vpop.f32.mrf.mxu0
        %v768 = vadd.f32 %v676, %v767
        %769 = vmatmul.bf16.gmra.mxu0 %v657
        %v770 = vpop.f32.mrf.mxu0
        %v771 = vadd.f32 %v676, %v770
        %v772 = vpop.f32.mrf.mxu0
        %v773 = vadd.f32 %v676, %v772
        %774 = vdwg.mxu0
        %v775 = vmax.f32 %v736, 0.0
        %v776 = vmax.f32 %v738, 0.0
        %v777 = vmax.f32 %v741, 0.0
        %v778 = vmax.f32 %v743, 0.0
        %v779 = vmax.f32 %v746, 0.0
        %v780 = vmax.f32 %v748, 0.0
        %v781 = vmax.f32 %v751, 0.0
        %v782 = vmax.f32 %v753, 0.0
        %v783 = vmax.f32 %v756, 0.0
        %v784 = vmax.f32 %v758, 0.0
        %v785 = vmax.f32 %v761, 0.0
        %v786 = vmax.f32 %v763, 0.0
        %v787 = vmax.f32 %v766, 0.0
        %v788 = vmax.f32 %v768, 0.0
        %v789 = vmax.f32 %v771, 0.0
        %v790 = vmax.f32 %v773, 0.0
        %v791 = vpack.c.bf16 %v776, %v775
        %v792 = vpack.c.bf16 %v778, %v777
        %v793 = vpack.c.bf16 %v780, %v779
        %v794 = vpack.c.bf16 %v782, %v781
        %v795 = vpack.c.bf16 %v784, %v783
        %v796 = vpack.c.bf16 %v786, %v785
        %v797 = vpack.c.bf16 %v788, %v787
        %v798 = vpack.c.bf16 %v790, %v789
        %v799 = vld [vmem:[#allocation2] sm:$0xf]
        %v800 = vld [vmem:[#allocation2 + $0x4] sm:$0xf]
        %v801 = vld [vmem:[#allocation2 + $0x8] sm:$0xf]
        %v802 = vld [vmem:[#allocation2 + $0xc] sm:$0xf]
        %v803 = vld [vmem:[#allocation2 + $0x10] sm:$0xf]
        %v804 = vld [vmem:[#allocation2 + $0x14] sm:$0xf]
        %v805 = vld [vmem:[#allocation2 + $0x18] sm:$0xf]
        %v806 = vld [vmem:[#allocation2 + $0x1c] sm:$0xf]
        %v807 = vld [vmem:[#allocation2 + $0x20] sm:$0xf]
        %v808 = vld [vmem:[#allocation2 + $0x24] sm:$0xf]
        %v809 = vld [vmem:[#allocation2 + $0x28] sm:$0xf]
        %v810 = vld [vmem:[#allocation2 + $0x2c] sm:$0xf]
        %v811 = vld [vmem:[#allocation2 + $0x30] sm:$0xf]
        %v812 = vld [vmem:[#allocation2 + $0x34] sm:$0xf]
        %v813 = vld [vmem:[#allocation2 + $0x38] sm:$0xf]
        %v814 = vld [vmem:[#allocation2 + $0x3c] sm:$0xf]
        %v815 = vld [vmem:[%s8] sm:$0x1]
        %v817 = vperm.slane %v815, 0
        %v835 = vunpack.c.l.b16 %v799
        %v836 = vunpack.c.l.b16 %v800
        %v837 = vunpack.c.l.b16 %v801
        %v838 = vunpack.c.l.b16 %v802
        %v839 = vunpack.c.l.b16 %v803
        %v840 = vunpack.c.l.b16 %v804
        %v841 = vunpack.c.l.b16 %v805
        %v842 = vunpack.c.l.b16 %v806
        %v843 = vunpack.c.l.b16 %v807
        %v844 = vunpack.c.l.b16 %v808
        %v845 = vunpack.c.l.b16 %v809
        %v846 = vunpack.c.l.b16 %v810
        %v847 = vunpack.c.l.b16 %v811
        %v848 = vunpack.c.l.b16 %v812
        %v849 = vunpack.c.l.b16 %v813
        %v850 = vunpack.c.l.b16 %v814
        %v851 = vpack.c.b16 %v836, %v835
        %v852 = vpack.c.b16 %v838, %v837
        %v853 = vpack.c.b16 %v840, %v839
        %v854 = vpack.c.b16 %v842, %v841
        %v855 = vpack.c.b16 %v844, %v843
        %v856 = vpack.c.b16 %v846, %v845
        %v857 = vpack.c.b16 %v848, %v847
        %v858 = vpack.c.b16 %v850, %v849
        %867 = vmatpush.bf16.msra.mxu0 %v858
        %868 = vmatpush.bf16.msra.mxu0 %v857
        %869 = vmatpush.bf16.msra.mxu0 %v856
        %870 = vmatpush.bf16.msra.mxu0 %v855
        %871 = vmatpush.bf16.msra.mxu0 %v854
        %872 = vmatpush.bf16.msra.mxu0 %v853
        %873 = vmatpush.bf16.msra.mxu0 %v852
        %874 = vmatpush.bf16.msra.mxu0 %v851
        %875 = vmatmul.bf16.gmra.mxu0 %v791
        %v876 = vpop.f32.mrf.mxu0
        %v877 = vadd.f32 %v817, %v876
        %v878 = vpop.f32.mrf.mxu0
        %v879 = vadd.f32 %v817, %v878
        %880 = vmatmul.bf16.gmra.mxu0 %v792
        %v881 = vpop.f32.mrf.mxu0
        %v882 = vadd.f32 %v817, %v881
        %v883 = vpop.f32.mrf.mxu0
        %v884 = vadd.f32 %v817, %v883
        %885 = vmatmul.bf16.gmra.mxu0 %v793
        %v886 = vpop.f32.mrf.mxu0
        %v887 = vadd.f32 %v817, %v886
        %v888 = vpop.f32.mrf.mxu0
        %v889 = vadd.f32 %v817, %v888
        %890 = vmatmul.bf16.gmra.mxu0 %v794
        %v891 = vpop.f32.mrf.mxu0
        %v892 = vadd.f32 %v817, %v891
        %v893 = vpop.f32.mrf.mxu0
        %v894 = vadd.f32 %v817, %v893
        %895 = vmatmul.bf16.gmra.mxu0 %v795
        %v896 = vpop.f32.mrf.mxu0
        %v897 = vadd.f32 %v817, %v896
        %v898 = vpop.f32.mrf.mxu0
        %v899 = vadd.f32 %v817, %v898
        %900 = vmatmul.bf16.gmra.mxu0 %v796
        %v901 = vpop.f32.mrf.mxu0
        %v902 = vadd.f32 %v817, %v901
        %v903 = vpop.f32.mrf.mxu0
        %v904 = vadd.f32 %v817, %v903
        %905 = vmatmul.bf16.gmra.mxu0 %v797
        %v906 = vpop.f32.mrf.mxu0
        %v907 = vadd.f32 %v817, %v906
        %v908 = vpop.f32.mrf.mxu0
        %v909 = vadd.f32 %v817, %v908
        %910 = vmatmul.bf16.gmra.mxu0 %v798
        %v911 = vpop.f32.mrf.mxu0
        %v912 = vadd.f32 %v817, %v911
        %v913 = vpop.f32.mrf.mxu0
        %v914 = vadd.f32 %v817, %v913
        %915 = vdwg.mxu0
        %916 = vst [vmem:[%s351] sm:$0xff] %v877
        %917 = vst [vmem:[%s351 + $0x8] sm:$0xff] %v879
        %918 = vst [vmem:[%s351 + $0x10] sm:$0xff] %v882
        %919 = vst [vmem:[%s351 + $0x18] sm:$0xff] %v884
        %920 = vst [vmem:[%s351 + $0x20] sm:$0xff] %v887
        %921 = vst [vmem:[%s351 + $0x28] sm:$0xff] %v889
        %922 = vst [vmem:[%s351 + $0x30] sm:$0xff] %v892
        %923 = vst [vmem:[%s351 + $0x38] sm:$0xff] %v894
        %924 = vst [vmem:[%s351 + $0x40] sm:$0xff] %v897
        %925 = vst [vmem:[%s351 + $0x48] sm:$0xff] %v899
        %926 = vst [vmem:[%s351 + $0x50] sm:$0xff] %v902
        %927 = vst [vmem:[%s351 + $0x58] sm:$0xff] %v904
        %928 = vst [vmem:[%s351 + $0x60] sm:$0xff] %v907
        %929 = vst [vmem:[%s351 + $0x68] sm:$0xff] %v909
        %930 = vst [vmem:[%s351 + $0x70] sm:$0xff] %v912
        %931 = vst [vmem:[%s351 + $0x78] sm:$0xff] %v914
        %s932 = smul.u32 16, %s21
        %p933 = scmp.lt.s32.totalorder %s932, 31
        %s934 = scalar_select %p933, %s932, 31
        %s935 = smul.addr %s934, 8
        %s936 = scalar_lea.vmem %s9, %s935
        // Predicated region
        $region61: #{mlp_regression_forward.1} parent=55 // pred_check
          %p937 = pneg %p233
        $region62: #{mlp_regression_forward.1} parent=55 // pred_check_branch
          %939 = sbr.rel (%p937) target = $region64
        $region63: #{mlp_regression_forward.1} parent=55 // pred_region
          %s940 = smul.u32 16, %s21
        $region64: #{mlp_regression_forward.1} parent=55 // pred_fallthru
          _
      $region56: #{mlp_regression_forward.1} parent=5 // pred_fallthru
        _
      %p941 = scmp.le.s32.totalorder 2, %s16
      // Predicated region
      $region65: #{mlp_regression_forward.1} parent=5 // pred_check
        %p942 = pneg %p941
      $region66: #{mlp_regression_forward.1} parent=5 // pred_check_branch
        %944 = sbr.rel (%p942) target = $region68
      $region67: #{mlp_regression_forward.1} parent=5 // pred_region
        %s945 = ssub.s32 %s16, 2
        // Predicated region
        $region69: #{mlp_regression_forward.1} parent=67 // pred_check
          %p946 = pneg %p239
        $region70: #{mlp_regression_forward.1} parent=67 // pred_check_branch
          %948 = sbr.rel (%p946) target = $region72
        $region71: #{mlp_regression_forward.1} parent=67 // pred_region
          %s949 = smul.u32 16, %s22
          %p950 = scmp.lt.s32.totalorder %s949, 31
          %s951 = scalar_select %p950, %s949, 31
          %s952 = smul.addr %s951, 8
          %s953 = scalar_lea.vmem %s9, %s952
        $region72: #{mlp_regression_forward.1} parent=67 // pred_fallthru
          _
      $region68: #{mlp_regression_forward.1} parent=5 // pred_fallthru
        _
    $region6: #{mlp_regression_forward.1} parent=1 // loop_footer
      %s20 = sadd.s32 1, %s16
    $region7: #{mlp_regression_forward.1} parent=1 // loop_footer_branch
      %15 = sbr.rel target = $region3
    $region8: #{mlp_regression_forward.1} parent=1 // loop_exit
      _
    %954 = vsyncpa [#allocation3], 1
    %s955 = scalar_lea.sflag [#allocation3], 1
    %956 = vsyncpa %s955, 1

</llo_original>
